<compile_context>
chip_gen: v7x
topology: tpu7x:2x2x1
jax: 0.10.0
libtpu: 0.0.40
codegen_flags: <defaults>
</compile_context>

<pallas_src>
import math

import jax
import jax.numpy as jnp
from jax.experimental import pallas as pl
from jax.experimental.pallas import tpu as pltpu

LANE = 128            # vreg lane width
MAX_TILE_ROWS = 4096  # (4096, 128) f32 block = 2 MiB per input per buffer
SUB = 8               # sublane granularity; rows of each per-core output block


def _cdiv(a: int, b: int) -> int:
    return -(-a // b)


def _make_mse_kernel(ignore_value: float, tile_rows: int, tiles_per_core: int,
                     valid_rows: int, need_row_mask: bool):
    ignore_value = float(ignore_value)

    def kernel(pred_ref, targ_ref, sum_ref, cnt_ref, acc_sum, acc_cnt):
        step = pl.program_id(1)   # "arbitrary" reduction axis

        @pl.when(step == 0)
        def _():
            acc_sum[...] = jnp.zeros_like(acc_sum)
            acc_cnt[...] = jnp.zeros_like(acc_cnt)

        # Cast in-kernel (hidden under the DMA of the next tile).
        p = pred_ref[...].astype(jnp.float32)
        t = targ_ref[...].astype(jnp.float32)
        mask = t != jnp.float32(ignore_value)

        if need_row_mask:
            # Only emitted when the grid does not tile the array exactly:
            # masks the partial last block and any clamped duplicate blocks.
            core = pl.program_id(0)
            g = core * tiles_per_core + step
            row0 = g * tile_rows
            row_ids = row0 + jax.lax.broadcasted_iota(
                jnp.int32, (tile_rows, LANE), 0)
            mask = mask & (row_ids < valid_rows)

        diff = jnp.where(mask, p - t, jnp.float32(0.0))

        # Hot loop: pure VPU elementwise + sublane-axis reduce into (1, 128)
        # lane-partials; no cross-lane reduction per step.
        acc_sum[...] += jnp.sum(diff * diff, axis=0, keepdims=True)
        acc_cnt[...] += jnp.sum(mask.astype(jnp.int32), axis=0, keepdims=True)

        @pl.when(step == pl.num_programs(1) - 1)
        def _():
            # Broadcast the (1, LANE) lane-partials over the lane-dense
            # (SUB, LANE) output block; the wrapper reads row 0 of each core
            # block and performs the final cross-lane sum.
            sum_ref[...] = jnp.zeros((SUB, LANE), jnp.float32) + acc_sum[...]
            cnt_ref[...] = jnp.zeros((SUB, LANE), jnp.int32) + acc_cnt[...]

    return kernel


def mse_ignore_index(predicted: jax.Array, target: jax.Array,
                     ignore_index: int = -100) -> jax.Array:
    """Pallas equivalent of _MSE.forward: mean((pred[mask]-target[mask])**2)."""
    assert predicted.shape == target.shape

    n = int(math.prod(predicted.shape))
    if n == 0:
        return jnp.array(jnp.nan, dtype=jnp.float32)

    pred_flat = predicted.reshape(-1)
    targ_flat = target.reshape(-1)

    # Only a sub-128 ragged tail is ever padded (target padded with
    # ignore_index so the pad is masked out in-kernel); the common
    # multiple-of-128 case is a free reshape with zero extra HBM traffic.
    if n % LANE != 0:
        pad = LANE - n % LANE
        pred_flat = jnp.pad(pred_flat, (0, pad))
        targ_flat = jnp.pad(targ_flat, (0, pad), constant_values=ignore_index)

    rows = pred_flat.shape[0] // LANE
    pred2d = pred_flat.reshape(rows, LANE)
    targ2d = targ_flat.reshape(rows, LANE)

    # Block = full array (small inputs) or 4096 rows (2 MiB f32 per block).
    tile_rows = rows if rows <= MAX_TILE_ROWS else MAX_TILE_ROWS
    num_blocks = _cdiv(rows, tile_rows)

    # Leading "parallel" axis: sharded across the 2 TensorCores on v7x;
    # a harmless sequential prefix on single-TC v5e/v6e.
    num_cores = 2 if num_blocks >= 2 else 1
    tiles_per_core = _cdiv(num_blocks, num_cores)
    last_block = num_blocks - 1

    # Row masking only needed when the grid doesn't tile the array exactly.
    need_row_mask = (rows % tile_rows != 0) or (num_blocks % num_cores != 0)

    def in_index_map(core, step):
        # Clamp so every DMA stays in bounds; any duplicated/overrun rows are
        # masked inside the kernel via the row-id iota (need_row_mask path).
        return (jnp.minimum(core * tiles_per_core + step, last_block), 0)

    kernel = _make_mse_kernel(float(ignore_index), tile_rows, tiles_per_core,
                              rows, need_row_mask)

    out_rows = num_cores * SUB
    ssum, scnt = pl.pallas_call(
        kernel,
        out_shape=(jax.ShapeDtypeStruct((out_rows, LANE), jnp.float32),
                   jax.ShapeDtypeStruct((out_rows, LANE), jnp.int32)),
        grid_spec=pltpu.PrefetchScalarGridSpec(
            num_scalar_prefetch=0,
            grid=(num_cores, tiles_per_core),
            in_specs=[
                pl.BlockSpec((tile_rows, LANE), in_index_map),
                pl.BlockSpec((tile_rows, LANE), in_index_map),
            ],
            out_specs=[
                pl.BlockSpec((SUB, LANE), lambda core, step: (core, 0)),
                pl.BlockSpec((SUB, LANE), lambda core, step: (core, 0)),
            ],
            scratch_shapes=[
                pltpu.VMEM((1, LANE), jnp.float32),
                pltpu.VMEM((1, LANE), jnp.int32),
            ],
        ),
        compiler_params=pltpu.CompilerParams(
            dimension_semantics=("parallel", "arbitrary")),
    )(pred2d, targ2d)

    # Row 0 of each per-core (SUB, LANE) block holds that core's lane-partials;
    # final cross-lane reduction + divide happen here in plain XLA.
    total = jnp.sum(ssum.reshape(num_cores, SUB, LANE)[:, 0, :])
    count = jnp.sum(scnt.reshape(num_cores, SUB, LANE)[:, 0, :])
    return (total / count.astype(jnp.float32)).astype(jnp.float32)


def _ref_mse(predicted, target, ignore_index):
    mask = target != ignore_index
    p = predicted.astype(jnp.float32)
    t = target.astype(jnp.float32)
    sq = jnp.where(mask, (p - t) ** 2, 0.0)
    return jnp.sum(sq) / jnp.sum(mask.astype(jnp.float32))


if __name__ == "__main__":
    ignore_index = -100
    key = jax.random.PRNGKey(0)
    kp, kt, km = jax.random.split(key, 3)

    # Main check: f32, 128-divisible element count (exact-fit, unmasked path).
    shape = (2, 4, 16, 16)
    predicted = jax.random.normal(kp, shape, dtype=jnp.float32)
    target = jax.random.normal(kt, shape, dtype=jnp.float32)
    drop = jax.random.uniform(km, shape) < 0.25
    target = jnp.where(drop, jnp.float32(ignore_index), target)

    loss = mse_ignore_index(predicted, target, ignore_index=ignore_index)
    loss = jax.block_until_ready(loss)
    ref = _ref_mse(predicted, target, ignore_index)
    assert jnp.allclose(loss, ref, rtol=1e-5, atol=1e-6), (loss, ref)

    # Ragged check: element count not a multiple of 128 (tail-pad path).
    kp2, kt2 = jax.random.split(kp)
    shape2 = (3, 5, 7)
    p2 = jax.random.normal(kp2, shape2, dtype=jnp.float32)
    t2 = jax.random.normal(kt2, shape2, dtype=jnp.float32)
    t2 = jnp.where(jax.random.uniform(km, shape2) < 0.3,
                   jnp.float32(ignore_index), t2)
    loss2 = jax.block_until_ready(mse_ignore_index(p2, t2, ignore_index))
    ref2 = _ref_mse(p2, t2, ignore_index)
    assert jnp.allclose(loss2, ref2, rtol=1e-5, atol=1e-6), (loss2, ref2)

    # bf16 check: in-kernel cast path.
    p3 = predicted.astype(jnp.bfloat16)
    t3 = target.astype(jnp.bfloat16)
    loss3 = jax.block_until_ready(mse_ignore_index(p3, t3, ignore_index))
    ref3 = _ref_mse(p3, t3, ignore_index)
    assert jnp.allclose(loss3, ref3, rtol=2e-2, atol=1e-3), (loss3, ref3)

    # Multi-block, partial last block: masked + megacore-sharded path.
    kp4, kt4, km4 = jax.random.split(kt, 3)
    shape4 = (10, 256, 256)   # 655360 elems -> 5120 rows -> 2 blocks, partial
    p4 = jax.random.normal(kp4, shape4, dtype=jnp.float32)
    t4 = jax.random.normal(kt4, shape4, dtype=jnp.float32)
    t4 = jnp.where(jax.random.uniform(km4, shape4) < 0.25,
                   jnp.float32(ignore_index), t4)
    loss4 = jax.block_until_ready(mse_ignore_index(p4, t4, ignore_index))
    ref4 = _ref_mse(p4, t4, ignore_index)
    assert jnp.allclose(loss4, ref4, rtol=1e-4, atol=1e-5), (loss4, ref4)

    # Exact-fit multi-step accumulation per core (unmasked, 2 steps / core).
    kp5, kt5, km5 = jax.random.split(km, 3)
    shape5 = (2, 1024, 1024)  # 2097152 elems -> 16384 rows -> 4 blocks exact
    p5 = jax.random.normal(kp5, shape5, dtype=jnp.float32)
    t5 = jax.random.normal(kt5, shape5, dtype=jnp.float32)
    t5 = jnp.where(jax.random.uniform(km5, shape5) < 0.25,
                   jnp.float32(ignore_index), t5)
    loss5 = jax.block_until_ready(mse_ignore_index(p5, t5, ignore_index))
    ref5 = _ref_mse(p5, t5, ignore_index)
    assert jnp.allclose(loss5, ref5, rtol=1e-4, atol=1e-5), (loss5, ref5)

    print("KERNEL_OK")
</pallas_src>

<mosaic_0001>
module attributes {stable_mosaic.version = 11 : i64} {
  func.func @kernel(%arg0: i32, %arg1: i32, %arg2: memref<16x128xf32, #tpu.memory_space<vmem>>, %arg3: memref<16x128xf32, #tpu.memory_space<vmem>>, %arg4: memref<8x128xf32, #tpu.memory_space<vmem>>, %arg5: memref<8x128xi32, #tpu.memory_space<vmem>>, %arg6: memref<1x128xf32, #tpu.memory_space<vmem>>, %arg7: memref<1x128xi32, #tpu.memory_space<vmem>>) attributes {dimension_semantics = [#tpu.dimension_semantics<parallel>, #tpu.dimension_semantics<arbitrary>], iteration_bounds = array<i64: 1, 1>, scalar_prefetch = 0 : i64, scratch_operands = 2 : i64, tpu.core_type = #tpu.core_type<tc>, window_params = [{transform_indices = @transform_0, window_bounds = array<i64: 16, 128>}, {transform_indices = @transform_1, window_bounds = array<i64: 16, 128>}, {transform_indices = @transform_2, window_bounds = array<i64: 8, 128>}, {transform_indices = @transform_3, window_bounds = array<i64: 8, 128>}]} {
    %c0_i32 = arith.constant 0 : i32
    %0 = arith.cmpi eq, %arg1, %c0_i32 : i32
    %1 = arith.extui %0 : i1 to i32
    %c0_i32_0 = arith.constant 0 : i32
    %2 = arith.cmpi ne, %1, %c0_i32_0 : i32
    scf.if %2 {
      %cst_17 = arith.constant 0.000000e+00 : f32
      %25 = vector.broadcast %cst_17 : f32 to vector<1x128xf32>
      %c0_18 = arith.constant 0 : index
      %c0_19 = arith.constant 0 : index
      %26 = vector.load %arg6[%c0_18, %c0_19] : memref<1x128xf32, #tpu.memory_space<vmem>>, vector<1x128xf32>
      tpu.vector_store %arg6[%c0_18, %c0_19], %25 {strides = array<i32>} : memref<1x128xf32, #tpu.memory_space<vmem>>, vector<1x128xf32>,
      %c0_i32_20 = arith.constant 0 : i32
      %27 = vector.broadcast %c0_i32_20 : i32 to vector<1x128xi32>
      %c0_21 = arith.constant 0 : index
      %c0_22 = arith.constant 0 : index
      %28 = vector.load %arg7[%c0_21, %c0_22] : memref<1x128xi32, #tpu.memory_space<vmem>>, vector<1x128xi32>
      tpu.vector_store %arg7[%c0_21, %c0_22], %27 {strides = array<i32>} : memref<1x128xi32, #tpu.memory_space<vmem>>, vector<1x128xi32>,
    } else {
    }
    %c0 = arith.constant 0 : index
    %c0_1 = arith.constant 0 : index
    %3 = vector.load %arg2[%c0, %c0_1] : memref<16x128xf32, #tpu.memory_space<vmem>>, vector<16x128xf32>
    %c0_2 = arith.constant 0 : index
    %c0_3 = arith.constant 0 : index
    %4 = vector.load %arg3[%c0_2, %c0_3] : memref<16x128xf32, #tpu.memory_space<vmem>>, vector<16x128xf32>
    %cst = arith.constant -1.000000e+02 : f32
    %5 = vector.broadcast %cst : f32 to vector<16x128xf32>
    %6 = arith.cmpf one, %4, %5 : vector<16x128xf32>
    %7 = arith.subf %3, %4 : vector<16x128xf32>
    %cst_4 = arith.constant 0.000000e+00 : f32
    %8 = vector.broadcast %cst_4 : f32 to vector<16x128xf32>
    %9 = arith.select %6, %7, %8 : vector<16x128xi1>, vector<16x128xf32>
    %c0_5 = arith.constant 0 : index
    %c0_6 = arith.constant 0 : index
    %10 = vector.load %arg6[%c0_5, %c0_6] : memref<1x128xf32, #tpu.memory_space<vmem>>, vector<1x128xf32>
    %11 = arith.mulf %9, %9 : vector<16x128xf32>
    %cst_7 = arith.constant dense<0.000000e+00> : vector<128xf32>
    %12 = vector.multi_reduction <add>, %11, %cst_7 [0] : vector<16x128xf32> to vector<128xf32>
    %13 = vector.shape_cast %12 : vector<128xf32> to vector<1x128xf32>
    %14 = arith.addf %10, %13 : vector<1x128xf32>
    %c0_8 = arith.constant 0 : index
    %c0_9 = arith.constant 0 : index
    %15 = vector.load %arg6[%c0_8, %c0_9] : memref<1x128xf32, #tpu.memory_space<vmem>>, vector<1x128xf32>
    tpu.vector_store %arg6[%c0_8, %c0_9], %14 {strides = array<i32>} : memref<1x128xf32, #tpu.memory_space<vmem>>, vector<1x128xf32>,
    %c0_10 = arith.constant 0 : index
    %c0_11 = arith.constant 0 : index
    %16 = vector.load %arg7[%c0_10, %c0_11] : memref<1x128xi32, #tpu.memory_space<vmem>>, vector<1x128xi32>
    %17 = arith.extui %6 : vector<16x128xi1> to vector<16x128xi32>
    %cst_12 = arith.constant dense<0> : vector<128xi32>
    %18 = vector.multi_reduction <add>, %17, %cst_12 [0] : vector<16x128xi32> to vector<128xi32>
    %19 = vector.shape_cast %18 : vector<128xi32> to vector<1x128xi32>
    %20 = arith.addi %16, %19 : vector<1x128xi32>
    %c0_13 = arith.constant 0 : index
    %c0_14 = arith.constant 0 : index
    %21 = vector.load %arg7[%c0_13, %c0_14] : memref<1x128xi32, #tpu.memory_space<vmem>>, vector<1x128xi32>
    tpu.vector_store %arg7[%c0_13, %c0_14], %20 {strides = array<i32>} : memref<1x128xi32, #tpu.memory_space<vmem>>, vector<1x128xi32>,
    %c0_i32_15 = arith.constant 0 : i32
    %22 = arith.cmpi eq, %arg1, %c0_i32_15 : i32
    %23 = arith.extui %22 : i1 to i32
    %c0_i32_16 = arith.constant 0 : i32
    %24 = arith.cmpi ne, %23, %c0_i32_16 : i32
    scf.if %24 {
      %cst_17 = arith.constant 0.000000e+00 : f32
      %25 = vector.broadcast %cst_17 : f32 to vector<8x128xf32>
      %c0_18 = arith.constant 0 : index
      %c0_19 = arith.constant 0 : index
      %26 = vector.load %arg6[%c0_18, %c0_19] : memref<1x128xf32, #tpu.memory_space<vmem>>, vector<1x128xf32>
      %27 = vector.broadcast %26 : vector<1x128xf32> to vector<8x128xf32>
      %28 = arith.addf %25, %27 : vector<8x128xf32>
      %c0_20 = arith.constant 0 : index
      %c0_21 = arith.constant 0 : index
      %29 = vector.load %arg4[%c0_20, %c0_21] : memref<8x128xf32, #tpu.memory_space<vmem>>, vector<8x128xf32>
      tpu.vector_store %arg4[%c0_20, %c0_21], %28 {strides = array<i32>} : memref<8x128xf32, #tpu.memory_space<vmem>>, vector<8x128xf32>,
      %c0_i32_22 = arith.constant 0 : i32
      %30 = vector.broadcast %c0_i32_22 : i32 to vector<8x128xi32>
      %c0_23 = arith.constant 0 : index
      %c0_24 = arith.constant 0 : index
      %31 = vector.load %arg7[%c0_23, %c0_24] : memref<1x128xi32, #tpu.memory_space<vmem>>, vector<1x128xi32>
      %32 = vector.broadcast %31 : vector<1x128xi32> to vector<8x128xi32>
      %33 = arith.addi %30, %32 : vector<8x128xi32>
      %c0_25 = arith.constant 0 : index
      %c0_26 = arith.constant 0 : index
      %34 = vector.load %arg5[%c0_25, %c0_26] : memref<8x128xi32, #tpu.memory_space<vmem>>, vector<8x128xi32>
      tpu.vector_store %arg5[%c0_25, %c0_26], %33 {strides = array<i32>} : memref<8x128xi32, #tpu.memory_space<vmem>>, vector<8x128xi32>,
    } else {
    }
    return
  }
  func.func @transform_0(%arg0: i32, %arg1: i32) -> (i32, i32) {
    %c1_i32 = arith.constant 1 : i32
    %0 = arith.muli %arg0, %c1_i32 : i32
    %1 = arith.addi %0, %arg1 : i32
    %c0_i32 = arith.constant 0 : i32
    %2 = arith.minsi %1, %c0_i32 : i32
    %c0_i32_0 = arith.constant 0 : i32
    %c0_i32_1 = arith.constant 0 : i32
    return %2, %c0_i32_0 : i32, i32
  }
  func.func @transform_1(%arg0: i32, %arg1: i32) -> (i32, i32) {
    %c1_i32 = arith.constant 1 : i32
    %0 = arith.muli %arg0, %c1_i32 : i32
    %1 = arith.addi %0, %arg1 : i32
    %c0_i32 = arith.constant 0 : i32
    %2 = arith.minsi %1, %c0_i32 : i32
    %c0_i32_0 = arith.constant 0 : i32
    %c0_i32_1 = arith.constant 0 : i32
    return %2, %c0_i32_0 : i32, i32
  }
  func.func @transform_2(%arg0: i32, %arg1: i32) -> (i32, i32) {
    %c0_i32 = arith.constant 0 : i32
    %c0_i32_0 = arith.constant 0 : i32
    return %arg0, %c0_i32 : i32, i32
  }
  func.func @transform_3(%arg0: i32, %arg1: i32) -> (i32, i32) {
    %c0_i32 = arith.constant 0 : i32
    %c0_i32_0 = arith.constant 0 : i32
    return %arg0, %c0_i32 : i32, i32
  }
}

</mosaic_0001>

<llo_original>
// kernel: tpu_custom_call.1
$region0: #{tpu_custom_call.1}
  #allocation0 [shape = 'u32[]', space=smem, size = 0x4, offset = 0x4, fixed_abs, tag = 'smem constant byte address 0x4 - core index']
  #allocation1 [shape = 'u32[144,128]{1,0:T(1,128)}', space=vmem, size = 0x12000, scoped, tag = 'internal scratch']
  #allocation2 [shape = 'f32[1,128]{1,0:T(1,128)}', space=vmem, size = 0x200, scoped, tag = 'scratch operand']
  #allocation3 [shape = 's32[1,128]{1,0:T(1,128)}', space=vmem, size = 0x200, scoped, tag = 'scratch operand']
  %s0 = inlined_call_operand.hbm [shape: f32[16,128], index: 0, kind: input, shape index: {}]
  %s1 = inlined_call_operand.hbm [shape: f32[16,128], index: 1, kind: input, shape index: {}]
  %s2 = inlined_call_operand.hbm [shape: f32[8,128], index: 2, kind: output, shape index: {0}]
  %s3 = inlined_call_operand.hbm [shape: s32[8,128], index: 3, kind: output, shape index: {1}]
  %4 = xla_tuple %s2, %s3
  %s5 = sld [smem:[#allocation0]]
  $region42: #{tpu_custom_call.1} parent=0
    _
  %s7 = ssub.s32 1, %s5
  %s8 = scalar_select 0, %s7, %s5
  $region1: #{tpu_custom_call.1} parent=0
    #allocation4 [shape = 'u8[8192]{0}', space=vmem, size = 0x2000, scoped, tag = 'input window, operand 0, single buffered']
    #allocation5 [shape = 's32[1]{0}', space=sflag, size = 0x4, scoped, tag = 'scoped memory for tpu_custom_call.1']
    #allocation6 [shape = 's32[1]{0}', space=sflag, size = 0x4, scoped, tag = 'scoped memory for tpu_custom_call.1']
    #allocation7 [shape = 'u8[8192]{0}', space=vmem, size = 0x2000, scoped, tag = 'input window, operand 1, single buffered']
    #allocation8 [shape = 's32[1]{0}', space=sflag, size = 0x4, scoped, tag = 'scoped memory for tpu_custom_call.1']
    #allocation9 [shape = 'u8[4096]{0}', space=vmem, size = 0x1000, scoped, tag = 'output window, operand 0, single buffered']
    #allocation10 [shape = 'u8[4096]{0}', space=vmem, size = 0x1000, scoped, tag = 'output window, operand 1, single buffered']
    #allocation11 [shape = 's32[1]{0}', space=sflag, size = 0x4, scoped, tag = 'scoped memory for tpu_custom_call.1']
    %9 = vsyncpa [#allocation5], 0
    %10 = vsyncpa [#allocation8], 0
    %11 = vsyncpa [#allocation6], 0
    %12 = vsyncpa [#allocation11], 0
    // Predicated region
    $region2: #{tpu_custom_call.1} parent=1 // pred_check
      _
    $region3: #{tpu_custom_call.1} parent=1 // pred_check_branch
      %14 = sbr.rel (0) target = $region5
    $region4: #{tpu_custom_call.1} parent=1 // pred_region
      %s15 = sadd.s32 0, 0
      %p16 = scmp.lt.s32.totalorder %s15, 0
      %s17 = scalar_select %p16, %s15, 0
      %s18 = smul.u32 2, %s17
      %s20 = ssub.s32 256, 256
      %21 = vsyncadd [#allocation5], %s20
      %s22 = smul.addr %s18, 128
      %s23 = scalar_lea.hbm %s0, %s22
      %s24 = sshll.u32 [#allocation4], 4
      %s25 = int_to_ptr.vmem [resolvable:$true] %s24
      %30 = dma.hbm_to_vmem [thread:$0]  %s23, 256, %s25, [#allocation5], 128, 128, 8
    $region5: #{tpu_custom_call.1} parent=1 // pred_fallthru
      _
    // Predicated region
    $region6: #{tpu_custom_call.1} parent=1 // pred_check
      _
    $region7: #{tpu_custom_call.1} parent=1 // pred_check_branch
      %32 = sbr.rel (0) target = $region9
    $region8: #{tpu_custom_call.1} parent=1 // pred_region
      %s33 = sadd.s32 0, 0
      %p34 = scmp.lt.s32.totalorder %s33, 0
      %s35 = scalar_select %p34, %s33, 0
      %s36 = smul.u32 2, %s35
      %s38 = ssub.s32 256, 256
      %39 = vsyncadd [#allocation8], %s38
      %s40 = smul.addr %s36, 128
      %s41 = scalar_lea.hbm %s1, %s40
      %s42 = sshll.u32 [#allocation7], 4
      %s43 = int_to_ptr.vmem [resolvable:$true] %s42
      %48 = dma.hbm_to_vmem [thread:$0]  %s41, 256, %s43, [#allocation8], 128, 128, 8
    $region9: #{tpu_custom_call.1} parent=1 // pred_fallthru
      _
    // Predicated region
    $region10: #{tpu_custom_call.1} parent=1 // pred_check
      _
    $region11: #{tpu_custom_call.1} parent=1 // pred_check_branch
      %50 = sbr.rel (0) target = $region13
    $region12: #{tpu_custom_call.1} parent=1 // pred_region
      %51 = dma.done [#allocation5], 256
    $region13: #{tpu_custom_call.1} parent=1 // pred_fallthru
      _
    // Predicated region
    $region14: #{tpu_custom_call.1} parent=1 // pred_check
      _
    $region15: #{tpu_custom_call.1} parent=1 // pred_check_branch
      %53 = sbr.rel (0) target = $region17
    $region16: #{tpu_custom_call.1} parent=1 // pred_region
      %54 = dma.done [#allocation8], 256
    $region17: #{tpu_custom_call.1} parent=1 // pred_fallthru
      _
    %s55 = sadd.s32 0, 0
    %p56 = scmp.lt.s32.totalorder %s55, 0
    %s57 = scalar_select %p56, %s55, 0
    %s58 = smul.u32 2, %s57
    %s59 = sadd.s32 0, 0
    %p60 = scmp.lt.s32.totalorder %s59, 0
    %s61 = scalar_select %p60, %s59, 0
    %s62 = smul.u32 2, %s61
    %p63 = scmp.eq.s32.totalorder 0, 0
    // Predicated region
    $region18: #{tpu_custom_call.1} parent=1 // pred_check
      %p64 = pneg %p63
    $region19: #{tpu_custom_call.1} parent=1 // pred_check_branch
      %66 = sbr.rel (%p64) target = $region21
    $region20: #{tpu_custom_call.1} parent=1 // pred_region
      %67 = vst [vmem:[#allocation2] sm:$0x1] 0.0
      %68 = vst [vmem:[#allocation3] sm:$0x1] 0
    $region21: #{tpu_custom_call.1} parent=1 // pred_fallthru
      _
    %v69 = vld [vmem:[#allocation4] sm:$0xff]
    %v70 = vld [vmem:[#allocation4 + $0x8] sm:$0xff]
    %v71 = vld [vmem:[#allocation7] sm:$0xff]
    %v72 = vld [vmem:[#allocation7 + $0x8] sm:$0xff]
    %vm73 = vcmp.ne.f32.partialorder %v71, -100.0
    %vm74 = vcmp.ne.f32.partialorder %v72, -100.0
    %v75 = vsub.f32 %v69, %v71
    %v76 = vsub.f32 %v70, %v72
    %v77 = vsel %vm73, %v75, 0.0
    %v78 = vsel %vm74, %v76, 0.0
    %v79 = vld [vmem:[#allocation2] sm:$0x1]
    %v80 = vmul.f32 %v77, %v77
    %v81 = vmul.f32 %v78, %v78
    %v82 = vadd.f32 %v80, %v81
    %v83 = vrot.slane %v82, 4
    %v84 = vadd.f32 %v82, %v83
    %v85 = vrot.slane %v84, 2
    %v86 = vadd.f32 %v84, %v85
    %v87 = vrot.slane %v86, 1
    %v88 = vadd.f32 %v86, %v87
    %v89 = vadd.f32 %v79, %v88
    %90 = vst [vmem:[#allocation2] sm:$0x1] %v89
    %v91 = vld [vmem:[#allocation3] sm:$0x1]
    %v92 = vsel %vm73, 1, 0
    %v93 = vsel %vm74, 1, 0
    %v94 = vadd.s32 %v92, %v93
    %v95 = vrot.slane %v94, 4
    %v96 = vadd.s32 %v94, %v95
    %v97 = vrot.slane %v96, 2
    %v98 = vadd.s32 %v96, %v97
    %v99 = vrot.slane %v98, 1
    %v100 = vadd.s32 %v98, %v99
    %v101 = vadd.s32 %v91, %v100
    %102 = vst [vmem:[#allocation3] sm:$0x1] %v101
    // Predicated region
    $region22: #{tpu_custom_call.1} parent=1 // pred_check
      %p103 = pneg %p63
    $region23: #{tpu_custom_call.1} parent=1 // pred_check_branch
      %105 = sbr.rel (%p103) target = $region25
    $region24: #{tpu_custom_call.1} parent=1 // pred_region
      %v106 = vld [vmem:[#allocation2] sm:$0x1]
      %v108 = vlaneseq
      %v109 = vshrl.u32 %v108, 7
      %v110 = vsub.s32 0, %v109
      %v111 = vrot.slane %v106, %v110
      %v113 = vadd.f32 %v111, 0.0
      %114 = vst [vmem:[#allocation9] sm:$0xff] %v113
      %v115 = vld [vmem:[#allocation3] sm:$0x1]
      %v116 = vlaneseq
      %v117 = vshrl.u32 %v116, 7
      %v118 = vsub.s32 0, %v117
      %v119 = vrot.slane %v115, %v118
      %120 = vst [vmem:[#allocation10] sm:$0xff] %v119
    $region25: #{tpu_custom_call.1} parent=1 // pred_fallthru
      _
    // Predicated region
    $region26: #{tpu_custom_call.1} parent=1 // pred_check
      _
    $region27: #{tpu_custom_call.1} parent=1 // pred_check_branch
      %122 = sbr.rel (0) target = $region29
    $region28: #{tpu_custom_call.1} parent=1 // pred_region
      %s124 = ssub.s32 128, 128
      %125 = vsyncadd [#allocation6], %s124
      %s127 = sshll.u32 [#allocation9], 4
      %s128 = int_to_ptr.vmem [resolvable:$true] %s127
      %130 = dma.vmem_to_hbm [thread:$0]  %s128, 128, %s2, [#allocation6]
    $region29: #{tpu_custom_call.1} parent=1 // pred_fallthru
      _
    // Predicated region
    $region30: #{tpu_custom_call.1} parent=1 // pred_check
      _
    $region31: #{tpu_custom_call.1} parent=1 // pred_check_branch
      %132 = sbr.rel (0) target = $region33
    $region32: #{tpu_custom_call.1} parent=1 // pred_region
      %s134 = ssub.s32 128, 128
      %135 = vsyncadd [#allocation11], %s134
      %s137 = sshll.u32 [#allocation10], 4
      %s138 = int_to_ptr.vmem [resolvable:$true] %s137
      %140 = dma.vmem_to_hbm [thread:$0]  %s138, 128, %s3, [#allocation11]
    $region33: #{tpu_custom_call.1} parent=1 // pred_fallthru
      _
    // Predicated region
    $region34: #{tpu_custom_call.1} parent=1 // pred_check
      _
    $region35: #{tpu_custom_call.1} parent=1 // pred_check_branch
      %142 = sbr.rel (0) target = $region37
    $region36: #{tpu_custom_call.1} parent=1 // pred_region
      %143 = dma.done [#allocation6], 128
    $region37: #{tpu_custom_call.1} parent=1 // pred_fallthru
      _
    // Predicated region
    $region38: #{tpu_custom_call.1} parent=1 // pred_check
      _
    $region39: #{tpu_custom_call.1} parent=1 // pred_check_branch
      %145 = sbr.rel (0) target = $region41
    $region40: #{tpu_custom_call.1} parent=1 // pred_region
      %146 = dma.done [#allocation11], 128
    $region41: #{tpu_custom_call.1} parent=1 // pred_fallthru
      _
    %147 = vsyncpa [#allocation5], 1
    %148 = vsyncpa [#allocation8], 1
    %149 = vsyncpa [#allocation6], 1
    %150 = vsyncpa [#allocation11], 1

</llo_original>
